<compile_context>
chip_gen: v5e
topology: v5e:2x2
jax: 0.10.0
libtpu: 0.0.40
codegen_flags: <defaults>
</compile_context>

<pallas_src>
import jax
import jax.numpy as jnp
from jax.experimental import pallas as pl
from jax.experimental.pallas import tpu as pltpu


# -----------------------------------------------------------------------------
# Kernel 1: template-mean pooling + linear projection + L2-norm + 100x scale.
#   x : (TG, K, C) block of the (2M, K, C) text features (group g = s*M + m)
#   w : (C, C) resident (pre-transposed weight)      b : (1, C) resident
#   o : (TG, C) block of the (2M, C) pooled/normalized/scaled table
# -----------------------------------------------------------------------------
def _text_pool_kernel(x_ref, w_ref, b_ref, o_ref):
    # Pool BEFORE projecting: mean_K(x) @ W + b == mean_K(x @ W + b)  (linearity)
    # -> K x fewer MXU flops and a K x smaller intermediate.
    pooled = jnp.mean(x_ref[...].astype(jnp.float32), axis=1)                 # (TG, C)
    y = jnp.dot(pooled, w_ref[...], preferred_element_type=jnp.float32) + b_ref[...]
    # Hoisted text-side L2 normalization + CLIP logit scale (done once per call,
    # not once per batch element / patch tile).
    inv = jax.lax.rsqrt(jnp.sum(y * y, axis=-1, keepdims=True) + 1e-12)
    o_ref[...] = (100.0 * y * inv).astype(o_ref.dtype)


def pool_text_features(text_features, w_t, bias, num_classes, *,
                       group_tile_bytes=8 * 1024 * 1024):
    N, C = text_features.shape
    M = num_classes
    G = 2 * M
    K = N // G
    # Contiguous reshape (free layout glue): row r = s*M*K + m*K + k -> group g = s*M + m.
    x3 = text_features.reshape(G, K, C)

    # Tile the group axis so the x block stays well under VMEM even for large M*K
    # (v7x: 64 MiB physical). Output sublane rule: TG must be a multiple of 8 or == G.
    bytes_per_group = K * C * 4
    if G * bytes_per_group <= group_tile_bytes:
        TG = G
    else:
        TG = min(G, max(8, (group_tile_bytes // bytes_per_group) // 8 * 8))
    grid_g = pl.cdiv(G, TG)

    flat = pl.pallas_call(
        _text_pool_kernel,
        out_shape=jax.ShapeDtypeStruct((G, C), jnp.float32),
        grid=(grid_g,),
        in_specs=[
            pl.BlockSpec((TG, K, C), lambda g: (g, 0, 0)),
            pl.BlockSpec((C, C), lambda g: (0, 0)),     # resident weight
            pl.BlockSpec((1, C), lambda g: (0, 0)),     # resident bias
        ],
        out_specs=pl.BlockSpec((TG, C), lambda g: (g, 0)),
        compiler_params=pltpu.CompilerParams(
            dimension_semantics=("parallel",),
            vmem_limit_bytes=48 * 1024 * 1024,
        ),
    )(x3, w_t, bias.reshape(1, C))

    # Layout glue on a tiny (2M, C) array: -> (M, C, 2) so kernel 2's matmul is
    # NN-form v(TL, C) @ t(C, 2) with no large transpose anywhere.
    return flat.reshape(2, M, C).transpose(1, 2, 0)


# -----------------------------------------------------------------------------
# Kernel 2: cosine similarity + 2-class softmax over patch tokens.
#   idx (SMEM, scalar-prefetched): (B,) int32 class index per sample
#   v : (TL, C) vision block (producer dtype)   t : (M, C, 2) resident text table
#   o : (TL, 2) block of the (B, L, 2) output
# -----------------------------------------------------------------------------
def _fusion_kernel(idx_ref, v_ref, t_ref, o_ref):
    b = pl.program_id(0)
    t = t_ref[idx_ref[b]]                                    # (C, 2): pre-normalized, x100
    v = v_ref[...].astype(jnp.float32)                       # (TL, C); no-op for f32 input
    # Fold the per-patch L2 norm into a post-matmul logit scale: no normalized copy
    # of v, only one TL*C elementwise pass (the v*v) plus the MXU matmul.
    ss = jnp.sum(v * v, axis=-1, keepdims=True)              # (TL, 1)
    raw = jnp.dot(v, t, preferred_element_type=jnp.float32)  # (TL, 2), NN-form, no transpose
    logits = raw * jax.lax.rsqrt(ss + 1e-12)
    # 2-class, max-subtracted softmax; all remaining work is on (TL, 2) arrays so it is
    # negligible and cannot overflow even with the 100x CLIP logit scale.
    mx = jnp.max(logits, axis=-1, keepdims=True)
    e = jnp.exp(logits - mx)
    o_ref[...] = (e / jnp.sum(e, axis=-1, keepdims=True)).astype(o_ref.dtype)


def cosine_fusion(cls_idx, text_table, vision_features, *, tile_l=2048):
    B, L, C = vision_features.shape
    M = text_table.shape[0]

    # Vision is read in the caller's dtype: no wrapper-side cast (a cast would add a
    # full extra HBM read+write pass before the bandwidth-bound kernel even starts).
    TL = L if L <= tile_l else max(8, (tile_l // 8) * 8)
    # v7x has 2 TensorCores: make sure a single-sample call still has >= 2 parallel
    # grid steps to shard across cores.
    if B == 1 and TL == L and L >= 16 and (L // 2) % 8 == 0:
        TL = L // 2
    grid_l = pl.cdiv(L, TL)

    return pl.pallas_call(
        _fusion_kernel,
        out_shape=jax.ShapeDtypeStruct((B, L, 2), jnp.float32),
        grid_spec=pltpu.PrefetchScalarGridSpec(
            num_scalar_prefetch=1,
            grid=(B, grid_l),
            in_specs=[
                pl.BlockSpec((None, TL, C), lambda b, l, idx: (b, l, 0)),
                pl.BlockSpec((M, C, 2), lambda b, l, idx: (0, 0, 0)),   # resident table
            ],
            out_specs=pl.BlockSpec((None, TL, 2), lambda b, l, idx: (b, l, 0)),
        ),
        compiler_params=pltpu.CompilerParams(
            dimension_semantics=("parallel", "parallel"),
            # Explicit: v5e's default scoped VMEM limit is 16 MiB; this stays
            # comfortably under v7x's 64 MiB physical VMEM.
            vmem_limit_bytes=48 * 1024 * 1024,
        ),
    )(cls_idx, vision_features, text_table)      # (B, L, 2), no wrapper transpose needed


# -----------------------------------------------------------------------------
# Module wrapper (parameter setup + class-name bookkeeping is glue).
# -----------------------------------------------------------------------------
class FusionModulePallas:
    def __init__(self, class_names, embedding_dim=None, key=None):
        self.class_names = list(class_names)
        self.class_name_to_idx = {n: i for i, n in enumerate(self.class_names)}
        self.embedding_dim = embedding_dim
        if embedding_dim is not None:
            k1, k2 = jax.random.split(key)
            bound = 1.0 / (embedding_dim ** 0.5)   # nn.Linear default uniform init
            W = jax.random.uniform(k1, (embedding_dim, embedding_dim),
                                   jnp.float32, -bound, bound)
            b = jax.random.uniform(k2, (embedding_dim,), jnp.float32, -bound, bound)
            self.w_t = W.T          # kernel computes x @ w_t + b  ==  x @ W.T + b
            self.b = b

    def __call__(self, text_features, vision_features, cls_names):
        M = len(self.class_names)
        C = text_features.shape[-1]
        if self.embedding_dim is None:
            w_t = jnp.eye(C, dtype=jnp.float32)
            b = jnp.zeros((C,), jnp.float32)
        else:
            w_t, b = self.w_t, self.b
        text_table = pool_text_features(text_features, w_t, b, M)       # (M, C, 2)
        # matches the PyTorch module's `.get(cls_name, 0)` fallback
        idx = jnp.array([self.class_name_to_idx.get(n, 0) for n in cls_names],
                        dtype=jnp.int32)
        return cosine_fusion(idx, text_table, vision_features)          # (B, L, 2)


# -----------------------------------------------------------------------------
# Pure-JAX reference for correctness checking (mirrors the PyTorch module:
# project, then pool, then normalize / 100*cos / softmax).
# -----------------------------------------------------------------------------
def _reference(text_features, vision_features, cls_names, class_names, w_t, b):
    M = len(class_names)
    C = text_features.shape[-1]
    K = text_features.shape[0] // (2 * M)
    y = text_features @ w_t + b
    pooled = y.reshape(2, M, K, C).mean(axis=2).transpose(1, 0, 2)     # (M, 2, C)
    idx = jnp.array([class_names.index(n) for n in cls_names])
    t = pooled[idx]                                                    # (B, 2, C)
    v = vision_features
    vn = v * jax.lax.rsqrt(jnp.sum(v * v, axis=-1, keepdims=True) + 1e-12)
    tn = t * jax.lax.rsqrt(jnp.sum(t * t, axis=-1, keepdims=True) + 1e-12)
    logits = 100.0 * jnp.einsum("blc,bnc->bln", vn, tn)
    return jax.nn.softmax(logits, axis=-1)


if __name__ == "__main__":
    M, K, C = 4, 8, 32       # classes, templates, embedding dim
    B, L = 2, 16             # batch, patch tokens

    class_names = [f"class_{i}" for i in range(M)]
    cls_names = ["class_1", "class_3"]

    key = jax.random.PRNGKey(0)
    k_txt, k_vis, k_params = jax.random.split(key, 3)
    text_features = jax.random.normal(k_txt, (2 * M * K, C), jnp.float32)
    vision_features = jax.random.normal(k_vis, (B, L, C), jnp.float32)

    module = FusionModulePallas(class_names, embedding_dim=C, key=k_params)
    out = module(text_features, vision_features, cls_names)
    out = jax.block_until_ready(out)

    ref = _reference(text_features, vision_features, cls_names, class_names,
                     module.w_t, module.b)
    assert out.shape == (B, L, 2)
    assert jnp.allclose(out, ref, atol=1e-4, rtol=1e-4)

    print("KERNEL_OK")
</pallas_src>

<mosaic_0001>
module attributes {stable_mosaic.version = 11 : i64} {
  func.func @_text_pool_kernel(%arg0: i32, %arg1: memref<8x8x32xf32, #tpu.memory_space<vmem>>, %arg2: memref<32x32xf32, #tpu.memory_space<vmem>>, %arg3: memref<1x32xf32, #tpu.memory_space<vmem>>, %arg4: memref<8x32xf32, #tpu.memory_space<vmem>>) attributes {dimension_semantics = [#tpu.dimension_semantics<parallel>], iteration_bounds = array<i64: 1>, scalar_prefetch = 0 : i64, scratch_operands = 0 : i64, tpu.core_type = #tpu.core_type<tc>, window_params = [{transform_indices = @transform_0, window_bounds = array<i64: 8, 8, 32>}, {pipeline_mode = #tpu.pipeline_mode<synchronous>, transform_indices = @transform_1, window_bounds = array<i64: 32, 32>}, {pipeline_mode = #tpu.pipeline_mode<synchronous>, transform_indices = @transform_2, window_bounds = array<i64: 1, 32>}, {transform_indices = @transform_3, window_bounds = array<i64: 8, 32>}]} {
    %c0 = arith.constant 0 : index
    %c0_0 = arith.constant 0 : index
    %c0_1 = arith.constant 0 : index
    %0 = vector.load %arg1[%c0, %c0_0, %c0_1] : memref<8x8x32xf32, #tpu.memory_space<vmem>>, vector<8x8x32xf32>
    %cst = arith.constant dense<0.000000e+00> : vector<8x32xf32>
    %1 = vector.multi_reduction <add>, %0, %cst [1] : vector<8x8x32xf32> to vector<8x32xf32>
    %cst_2 = arith.constant 8.000000e+00 : f32
    %2 = vector.broadcast %cst_2 : f32 to vector<8x32xf32>
    %3 = arith.divf %1, %2 : vector<8x32xf32>
    %c0_3 = arith.constant 0 : index
    %c0_4 = arith.constant 0 : index
    %4 = vector.load %arg2[%c0_3, %c0_4] : memref<32x32xf32, #tpu.memory_space<vmem>>, vector<32x32xf32>
    %cst_5 = arith.constant dense<0.000000e+00> : vector<8x32xf32>
    %5 = tpu.matmul %3, %4, %cst_5 {dimension_numbers = #tpu.dot_dimension_numbers<[1], [0], [0], [1], [0, 0, 1, 1], [], []>} : vector<8x32xf32>, vector<32x32xf32>, vector<8x32xf32> -> vector<8x32xf32>
    %c0_6 = arith.constant 0 : index
    %c0_7 = arith.constant 0 : index
    %6 = vector.load %arg3[%c0_6, %c0_7] : memref<1x32xf32, #tpu.memory_space<vmem>>, vector<1x32xf32>
    %7 = vector.broadcast %6 : vector<1x32xf32> to vector<8x32xf32>
    %8 = arith.addf %5, %7 : vector<8x32xf32>
    %9 = arith.mulf %8, %8 : vector<8x32xf32>
    %cst_8 = arith.constant dense<0.000000e+00> : vector<8xf32>
    %10 = vector.multi_reduction <add>, %9, %cst_8 [1] : vector<8x32xf32> to vector<8xf32>
    %11 = vector.shape_cast %10 : vector<8xf32> to vector<8x1xf32>
    %cst_9 = arith.constant 9.99999996E-13 : f32
    %12 = vector.broadcast %cst_9 : f32 to vector<8x1xf32>
    %13 = arith.addf %11, %12 : vector<8x1xf32>
    %14 = math.rsqrt %13 : vector<8x1xf32>
    %cst_10 = arith.constant 1.000000e+02 : f32
    %15 = vector.broadcast %cst_10 : f32 to vector<8x32xf32>
    %16 = arith.mulf %15, %8 : vector<8x32xf32>
    %17 = vector.broadcast %14 : vector<8x1xf32> to vector<8x32xf32>
    %18 = arith.mulf %16, %17 : vector<8x32xf32>
    %c0_11 = arith.constant 0 : index
    %c0_12 = arith.constant 0 : index
    %19 = vector.load %arg4[%c0_11, %c0_12] : memref<8x32xf32, #tpu.memory_space<vmem>>, vector<8x32xf32>
    tpu.vector_store %arg4[%c0_11, %c0_12], %18 {strides = array<i32>} : memref<8x32xf32, #tpu.memory_space<vmem>>, vector<8x32xf32>,
    return
  }
  func.func @transform_0(%arg0: i32) -> (i32, i32, i32) {
    %c0_i32 = arith.constant 0 : i32
    %c0_i32_0 = arith.constant 0 : i32
    %c0_i32_1 = arith.constant 0 : i32
    return %arg0, %c0_i32, %c0_i32_0 : i32, i32, i32
  }
  func.func @transform_1(%arg0: i32) -> (i32, i32) {
    %c0_i32 = arith.constant 0 : i32
    %c0_i32_0 = arith.constant 0 : i32
    %c0_i32_1 = arith.constant 0 : i32
    return %c0_i32, %c0_i32_0 : i32, i32
  }
  func.func @transform_2(%arg0: i32) -> (i32, i32) {
    %c0_i32 = arith.constant 0 : i32
    %c0_i32_0 = arith.constant 0 : i32
    %c0_i32_1 = arith.constant 0 : i32
    return %c0_i32, %c0_i32_0 : i32, i32
  }
  func.func @transform_3(%arg0: i32) -> (i32, i32) {
    %c0_i32 = arith.constant 0 : i32
    %c0_i32_0 = arith.constant 0 : i32
    return %arg0, %c0_i32 : i32, i32
  }
}

</mosaic_0001>

<llo_original>
// kernel: tpu_custom_call.1
$region0: #{tpu_custom_call.1}
  #allocation0 [shape = 'u32[]', space=smem, size = 0x4, offset = 0x4, fixed_abs, tag = 'smem constant byte address 0x4 - core index']
  #allocation1 [shape = 'u32[72,128]{1,0:T(1,128)}', space=vmem, size = 0x9000, scoped, tag = 'internal scratch']
  %s0 = inlined_call_operand.hbm [shape: f32[8,8,32], index: 0, kind: input, shape index: {}]
  %s1 = inlined_call_operand.hbm [shape: f32[32,32], index: 1, kind: input, shape index: {}]
  %s2 = inlined_call_operand.vmem [shape: f32[1,32], index: 2, kind: input, shape index: {}]
  %s3 = inlined_call_operand.hbm [shape: f32[8,32], index: 3, kind: output, shape index: {}]
  %s4 = sld [smem:[#allocation0]]
  $region30: #{tpu_custom_call.1} parent=0
    _
  %s6 = ssub.s32 1, %s4
  %s7 = scalar_select 0, %s6, %s4
  $region1: #{tpu_custom_call.1} parent=0
    #allocation2 [shape = 'u8[32768]{0}', space=vmem, size = 0x8000, scoped, tag = 'input window, operand 0, single buffered']
    #allocation3 [shape = 's32[1]{0}', space=sflag, size = 0x4, scoped, tag = 'scoped memory for tpu_custom_call.1']
    #allocation4 [shape = 's32[1]{0}', space=sflag, size = 0x4, scoped, tag = 'scoped memory for tpu_custom_call.1']
    #allocation5 [shape = 'u8[16384]{0}', space=vmem, size = 0x4000, scoped, tag = 'input window, operand 1, single buffered']
    #allocation6 [shape = 's32[1]{0}', space=sflag, size = 0x4, scoped, tag = 'scoped memory for tpu_custom_call.1']
    #allocation7 [shape = 'u8[4096]{0}', space=vmem, size = 0x1000, scoped, tag = 'output window, operand 0, single buffered']
    %8 = vsyncpa [#allocation3], 0
    %9 = vsyncpa [#allocation6], 0
    %10 = vsyncpa [#allocation4], 0
    // Predicated region
    $region2: #{tpu_custom_call.1} parent=1 // pred_check
      _
    $region3: #{tpu_custom_call.1} parent=1 // pred_check_branch
      %12 = sbr.rel (0) target = $region5
    $region4: #{tpu_custom_call.1} parent=1 // pred_region
      %14 = vsyncadd [#allocation3], 0
      %s15 = sshll.u32 %s0, 4
      %s16 = int_to_ptr.hbm [resolvable:$true] %s15
      %s17 = sshll.u32 [#allocation2], 4
      %s18 = int_to_ptr.vmem [resolvable:$true] %s17
      %23 = dma.hbm_to_vmem [thread:$0]  %s16, 1024, %s18, [#allocation3], 128, 128, 8
    $region5: #{tpu_custom_call.1} parent=1 // pred_fallthru
      _
    // Predicated region
    $region6: #{tpu_custom_call.1} parent=1 // pred_check
      _
    $region7: #{tpu_custom_call.1} parent=1 // pred_check_branch
      %25 = sbr.rel (0) target = $region9
    $region8: #{tpu_custom_call.1} parent=1 // pred_region
      %27 = vsyncadd [#allocation6], 0
      %s28 = sshll.u32 %s1, 4
      %s29 = int_to_ptr.hbm [resolvable:$true] %s28
      %s30 = sshll.u32 [#allocation5], 4
      %s31 = int_to_ptr.vmem [resolvable:$true] %s30
      %36 = dma.hbm_to_vmem [thread:$0]  %s29, 512, %s31, [#allocation6], 128, 128, 8
    $region9: #{tpu_custom_call.1} parent=1 // pred_fallthru
      _
    // Predicated region
    $region10: #{tpu_custom_call.1} parent=1 // pred_check
      _
    $region11: #{tpu_custom_call.1} parent=1 // pred_check_branch
      %38 = sbr.rel (0) target = $region13
    $region12: #{tpu_custom_call.1} parent=1 // pred_region
      _
    $region13: #{tpu_custom_call.1} parent=1 // pred_fallthru
      _
    // Predicated region
    $region14: #{tpu_custom_call.1} parent=1 // pred_check
      _
    $region15: #{tpu_custom_call.1} parent=1 // pred_check_branch
      %40 = sbr.rel (0) target = $region17
    $region16: #{tpu_custom_call.1} parent=1 // pred_region
      %42 = dma.done [#allocation3], 1024
    $region17: #{tpu_custom_call.1} parent=1 // pred_fallthru
      _
    // Predicated region
    $region18: #{tpu_custom_call.1} parent=1 // pred_check
      _
    $region19: #{tpu_custom_call.1} parent=1 // pred_check_branch
      %44 = sbr.rel (0) target = $region21
    $region20: #{tpu_custom_call.1} parent=1 // pred_region
      %46 = dma.done [#allocation6], 512
    $region21: #{tpu_custom_call.1} parent=1 // pred_fallthru
      _
    %v47 = vld [vmem:[#allocation2] sm:$0xff]
    %v48 = vld [vmem:[#allocation2 + $0x8] sm:$0xff]
    %v49 = vld [vmem:[#allocation2 + $0x10] sm:$0xff]
    %v50 = vld [vmem:[#allocation2 + $0x18] sm:$0xff]
    %v51 = vld [vmem:[#allocation2 + $0x20] sm:$0xff]
    %v52 = vld [vmem:[#allocation2 + $0x28] sm:$0xff]
    %v53 = vld [vmem:[#allocation2 + $0x30] sm:$0xff]
    %v54 = vld [vmem:[#allocation2 + $0x38] sm:$0xff]
    %vm55 = vcmask 261120
    %v56 = vsel %vm55, %v47, 0.0
    %v57 = vrot.slane %v56, 4
    %v58 = vadd.f32 %v56, %v57
    %v59 = vrot.slane %v58, 2
    %v60 = vadd.f32 %v58, %v59
    %v61 = vrot.slane %v60, 1
    %v62 = vadd.f32 %v60, %v61
    %v63 = vsel %vm55, %v48, 0.0
    %v64 = vrot.slane %v63, 4
    %v65 = vadd.f32 %v63, %v64
    %v66 = vrot.slane %v65, 2
    %v67 = vadd.f32 %v65, %v66
    %v68 = vrot.slane %v67, 1
    %v69 = vadd.f32 %v67, %v68
    %v70 = vsel %vm55, %v49, 0.0
    %v71 = vrot.slane %v70, 4
    %v72 = vadd.f32 %v70, %v71
    %v73 = vrot.slane %v72, 2
    %v74 = vadd.f32 %v72, %v73
    %v75 = vrot.slane %v74, 1
    %v76 = vadd.f32 %v74, %v75
    %v77 = vsel %vm55, %v50, 0.0
    %v78 = vrot.slane %v77, 4
    %v79 = vadd.f32 %v77, %v78
    %v80 = vrot.slane %v79, 2
    %v81 = vadd.f32 %v79, %v80
    %v82 = vrot.slane %v81, 1
    %v83 = vadd.f32 %v81, %v82
    %v84 = vsel %vm55, %v51, 0.0
    %v85 = vrot.slane %v84, 4
    %v86 = vadd.f32 %v84, %v85
    %v87 = vrot.slane %v86, 2
    %v88 = vadd.f32 %v86, %v87
    %v89 = vrot.slane %v88, 1
    %v90 = vadd.f32 %v88, %v89
    %v91 = vsel %vm55, %v52, 0.0
    %v92 = vrot.slane %v91, 4
    %v93 = vadd.f32 %v91, %v92
    %v94 = vrot.slane %v93, 2
    %v95 = vadd.f32 %v93, %v94
    %v96 = vrot.slane %v95, 1
    %v97 = vadd.f32 %v95, %v96
    %v98 = vsel %vm55, %v53, 0.0
    %v99 = vrot.slane %v98, 4
    %v100 = vadd.f32 %v98, %v99
    %v101 = vrot.slane %v100, 2
    %v102 = vadd.f32 %v100, %v101
    %v103 = vrot.slane %v102, 1
    %v104 = vadd.f32 %v102, %v103
    %v105 = vsel %vm55, %v54, 0.0
    %v106 = vrot.slane %v105, 4
    %v107 = vadd.f32 %v105, %v106
    %v108 = vrot.slane %v107, 2
    %v109 = vadd.f32 %v107, %v108
    %v110 = vrot.slane %v109, 1
    %v111 = vadd.f32 %v109, %v110
    %v112 = vrcp.pop 8.0
    %v113 = vmul.f32 8.0, %v112
    %v114 = vsub.f32 1.0, %v113
    %v115 = vmul.f32 %v112, %v114
    %v116 = vadd.f32 %v112, %v115
    %vm117 = vweird.f32 %v112
    %v118 = vsel %vm117, %v112, %v116
    %v119 = vmul.f32 %v62, %v118
    %v120 = vmul.f32 %v69, %v118
    %v121 = vmul.f32 %v76, %v118
    %v122 = vmul.f32 %v83, %v118
    %v123 = vmul.f32 %v90, %v118
    %v124 = vmul.f32 %v97, %v118
    %v125 = vmul.f32 %v104, %v118
    %v126 = vmul.f32 %v111, %v118
    %v127 = vld [vmem:[#allocation5] sm:$0xff]
    %v128 = vld [vmem:[#allocation5 + $0x8] sm:$0xff]
    %v129 = vld [vmem:[#allocation5 + $0x10] sm:$0xff]
    %v130 = vld [vmem:[#allocation5 + $0x18] sm:$0xff]
    %v131 = vld [vmem:[%s2] sm:$0x1]
    %v133 = vperm.slane %v131, 0
    %vm143 = vcmask 1041409
    %v144 = vsel %vm143, %v120, %v119
    %vm145 = vcmask 1042434
    %v146 = vsel %vm145, %v121, %v144
    %vm147 = vcmask 1043459
    %v148 = vsel %vm147, %v122, %v146
    %vm149 = vcmask 1044484
    %v150 = vsel %vm149, %v123, %v148
    %vm151 = vcmask 1045509
    %v152 = vsel %vm151, %v124, %v150
    %vm153 = vcmask 1046534
    %v154 = vsel %vm153, %v125, %v152
    %vm155 = vcmask 1047559
    %v156 = vsel %vm155, %v126, %v154
    %v157 = vsel %vm55, %v156, 0
    %159 = vmatpush.msra.mxu0 0.0
    %160 = vmatpush.msra.mxu0 0.0
    %161 = vmatpush.msra.mxu0 0.0
    %162 = vmatpush.msra.mxu0 0.0
    %163 = vmatpush.msra.mxu0 0.0
    %164 = vmatpush.msra.mxu0 0.0
    %165 = vmatpush.msra.mxu0 0.0
    %166 = vmatpush.msra.mxu0 0.0
    %167 = vmatpush.msra.mxu0 0.0
    %168 = vmatpush.msra.mxu0 0.0
    %169 = vmatpush.msra.mxu0 0.0
    %170 = vmatpush.msra.mxu0 0.0
    %171 = vmatpush.msra.mxu0 %v130
    %172 = vmatpush.msra.mxu0 %v129
    %173 = vmatpush.msra.mxu0 %v128
    %174 = vmatpush.msra.mxu0 %v127
    %175 = vmatmul.f32.gmra.mxu0 %v157
    %v176 = vpop.f32.mrf.mxu0
    %v177 = vadd.f32 %v133, %v176
    %178 = vdwg.mxu0
    %v179 = vmul.f32 %v177, %v177
    %v180 = vsel %vm55, %v179, 0.0
    %181 = vadd.xlane.f32.xlu0 %v180
    %v182 = vpop.xlane.xlu0 %181
    %v183 = vadd.f32 %v182, 1e-12
    %v184 = vrsqrt.pop %v183
    %v185 = vmul.f32 %v184, %v183
    %v186 = vmul.f32 %v185, %v184
    %v187 = vmul.f32 0.5, %v186
    %v188 = vsub.f32 1.5, %v187
    %v189 = vmul.f32 %v184, %v188
    %vm190 = vweird.f32 %v183
    %vm191 = vweird.f32 %v184
    %vm192 = vmor %vm190, %vm191
    %v193 = vsel %vm192, %v184, %v189
    %v194 = vmul.f32 %v177, 100.0
    %v195 = vmul.f32 %v194, %v193
    %196 = vst.msk [vmem:[#allocation7] sm:$0xff] %vm55, %v195
    // Predicated region
    $region22: #{tpu_custom_call.1} parent=1 // pred_check
      _
    $region23: #{tpu_custom_call.1} parent=1 // pred_check_branch
      %198 = sbr.rel (0) target = $region25
    $region24: #{tpu_custom_call.1} parent=1 // pred_region
      %200 = vsyncadd [#allocation4], 0
      %s202 = sshll.u32 [#allocation7], 4
      %s203 = int_to_ptr.vmem [resolvable:$true] %s202
      %s204 = sshll.u32 %s3, 4
      %s205 = int_to_ptr.hbm [resolvable:$true] %s204
      %207 = dma.vmem_to_hbm [thread:$0]  %s203, 128, %s205, [#allocation4]
    $region25: #{tpu_custom_call.1} parent=1 // pred_fallthru
      _
    // Predicated region
    $region26: #{tpu_custom_call.1} parent=1 // pred_check
      _
    $region27: #{tpu_custom_call.1} parent=1 // pred_check_branch
      %209 = sbr.rel (0) target = $region29
    $region28: #{tpu_custom_call.1} parent=1 // pred_region
      %211 = dma.done [#allocation4], 128
    $region29: #{tpu_custom_call.1} parent=1 // pred_fallthru
      _
    %212 = vsyncpa [#allocation3], 1
    %213 = vsyncpa [#allocation6], 1
    %214 = vsyncpa [#allocation4], 1

</llo_original>
